<compile_context>
chip_gen: v7x
topology: tpu7x:2x2x1
jax: 0.10.0
libtpu: 0.0.40
codegen_flags: <defaults>
</compile_context>

<pallas_src>
import functools

import jax
import jax.numpy as jnp
import numpy as np
from jax.experimental import pallas as pl
from jax.experimental.pallas import tpu as pltpu


def _round_up(x: int, m: int) -> int:
    return ((x + m - 1) // m) * m


def _cdiv(a: int, b: int) -> int:
    return (a + b - 1) // b


# ---------------------------------------------------------------------------
# Tile-local window matrix: W[s, t] = 1  iff  t*stride <= s < t*stride + min.
# It is identical for every grid step, so build it once per configuration
# with numpy and cache the device array (review item: cache W per config).
# ---------------------------------------------------------------------------
@functools.lru_cache(maxsize=None)
def _window_matrix(kk: int, t_tile: int, min_w: int, stride: int, dtype_name: str):
    s = np.arange(kk)[:, None]                      # (KK, 1)
    starts = np.arange(t_tile)[None, :] * stride    # (1, T_TILE)
    w = ((s >= starts) & (s < starts + min_w)).astype(np.float32)
    return jnp.asarray(w, dtype=jnp.dtype(dtype_name))


def _vmem_budget():
    """Generation-aware VMEM limit (compiler) and tile budget (ours)."""
    cap = 64 * 1024 * 1024            # conservative fallback == v7x physical VMEM
    try:
        info = pltpu.get_tpu_info()
        cap = int(getattr(info, "vmem_capacity_bytes", cap))
    except Exception:
        pass
    # ~0.58 of physical: ~38 MiB on v7x (64 MiB), ~76 MiB on v5e/v6e (128 MiB).
    limit = min(int(cap * 0.58), 96 * 1024 * 1024)
    budget = int(limit * 0.75)        # headroom for compiler-internal scratch
    return limit, budget


def _pick_row_tile(r_pad0, n_t, k_blk, k_tail, t_tile,
                   in_itemsize, mm_itemsize, budget):
    """Largest 128-aligned row tile whose *full* VMEM footprint fits `budget`.

    Accounts for (review item: fix VMEM accounting):
      - both x bands, double-buffered, in the input dtype
      - the f32 output tile, double-buffered
      - in-kernel f32 temporaries (concat / centered / squared / stacked operand)
      - the bf16 stacked operand when the fast matmul path is used
      - the dot result and var/std temporaries
      - W with its two pipeline buffers (fixed cost, not per row)
    """
    kk = k_blk + k_tail
    per_row = 2 * (k_blk + k_tail) * in_itemsize
    per_row += 2 * t_tile * 4
    per_row += 4 * kk * 4
    if mm_itemsize != 4:
        per_row += 2 * kk * mm_itemsize
    per_row += 3 * t_tile * 4
    fixed = 2 * kk * t_tile * mm_itemsize
    fixed += 1 * 1024 * 1024          # slack for compiler internal scratch
    tr = (budget - fixed) // max(per_row, 1)
    tr = max(128, min(int(tr), 2048))
    tr = (tr // 128) * 128            # TR mult of 128 -> stacked M = 2*TR >= 256
    tr = min(tr, r_pad0)
    # v7x megacore: make sure there are >= 2 parallel grid steps when possible.
    if n_t * _cdiv(r_pad0, tr) < 2 and r_pad0 >= 256:
        tr = max(128, ((r_pad0 // 2) // 128) * 128)
    return tr


def _make_kernel(min_w: int, tr: int, mm_dtype):
    inv_w = 1.0 / float(min_w)
    inv_dof = 1.0 / float(min_w - 1)

    def kernel(xm_ref, xt_ref, w_ref, o_ref):
        # Main K band + tail band (window overlap into the next band).
        xm = xm_ref[...].astype(jnp.float32)                 # (TR, K_BLK)
        xt = xt_ref[...].astype(jnp.float32)                 # (TR, K_TAIL)
        x = jnp.concatenate([xm, xt], axis=1)                # (TR, KK)
        # Per-row centering: variance is shift invariant, and this removes the
        # one-pass formula's catastrophic cancellation for large-mean data.
        mu = jnp.mean(x, axis=1, keepdims=True)
        xc = x - mu
        # Fused matmul: stack [xc ; xc^2] so W goes through the MXU once.
        xs = jnp.concatenate([xc, xc * xc], axis=0).astype(mm_dtype)  # (2TR, KK)
        s = jnp.dot(xs, w_ref[...], preferred_element_type=jnp.float32)
        s1 = s[:tr]                                          # window sums
        s2 = s[tr:]                                          # window sums of squares
        var = (s2 - s1 * s1 * inv_w) * inv_dof
        # fp rounding can make var slightly negative; clamp before sqrt.
        o_ref[...] = jnp.sqrt(jnp.maximum(var, 0.0))         # lane-dense store

    return kernel


def ts_stddev(x, min_w: int, stride: int, *, use_bf16_matmul: bool = False):
    """Pallas implementation of TsStddev.forward.

    x: (batch, num_features, seq_len), any float dtype.
    Returns float32 (batch, num_features, out_seq).
    use_bf16_matmul: ~3x MXU throughput, ~1e-3 relative error on the stddev.
    """
    if min_w < 2:
        raise ValueError("TsStddev requires min >= 2 (sample stddev divides by min - 1).")
    if stride < 1:
        raise ValueError("TsStddev requires stride >= 1.")
    B, F, S = x.shape
    if S < min_w:
        raise ValueError("seq_length must be >= min (out_seq would be <= 0).")

    T = (S - min_w) // stride + 1
    R = B * F
    mm_dtype = jnp.bfloat16 if use_bf16_matmul else jnp.float32

    # ---- T tiling: lane-dense output, 256-wide N for v6e/v7x when T is big ----
    t_tile = 128 if T <= 128 else 256
    # The band of one tile must cover at least one full window.
    t_tile = max(t_tile, _round_up(_cdiv(min_w, stride), 128))
    n_t = _cdiv(T, t_tile)
    t_pad = n_t * t_tile

    # ---- banded K tiling -------------------------------------------------------
    k_blk = t_tile * stride                      # multiple of 128
    overlap = max(min_w - stride, 1)             # max spill of a window past K_BLK
    k_tail = 128 if overlap <= 128 else k_blk    # must divide K_BLK
    kk = k_blk + k_tail
    s_pad = max((n_t + 1) * k_blk, _round_up(S, k_blk))

    # ---- R tiling (VMEM-budgeted, generation aware) ----------------------------
    r_pad0 = _round_up(R, 128)
    vmem_limit, budget = _vmem_budget()
    tr = _pick_row_tile(r_pad0, n_t, k_blk, k_tail, t_tile,
                        jnp.dtype(x.dtype).itemsize,
                        jnp.dtype(mm_dtype).itemsize, budget)
    r_pad = _round_up(r_pad0, tr)

    x2d = x.reshape(R, S)                        # native dtype; cast in-kernel
    x2d = jnp.pad(x2d, ((0, r_pad - R), (0, s_pad - S)))

    w = _window_matrix(kk, t_tile, min_w, stride, jnp.dtype(mm_dtype).name)

    tail_factor = k_blk // k_tail
    kernel = _make_kernel(min_w, tr, mm_dtype)

    out2d = pl.pallas_call(
        kernel,
        out_shape=jax.ShapeDtypeStruct((r_pad, t_pad), jnp.float32),
        grid=(r_pad // tr, n_t),
        in_specs=[
            # main band of x for T-tile j: columns [j*K_BLK, (j+1)*K_BLK)
            pl.BlockSpec((tr, k_blk), lambda i, j: (i, j)),
            # tail band: columns [(j+1)*K_BLK, (j+1)*K_BLK + K_TAIL)
            pl.BlockSpec((tr, k_tail), lambda i, j: (i, (j + 1) * tail_factor)),
            # constant window matrix (same block every step -> fetched once).
            pl.BlockSpec((kk, t_tile), lambda i, j: (0, 0)),
        ],
        out_specs=pl.BlockSpec((tr, t_tile), lambda i, j: (i, j)),
        compiler_params=pltpu.CompilerParams(
            dimension_semantics=("parallel", "parallel"),
            vmem_limit_bytes=vmem_limit,
        ),
    )(x2d, x2d, w)

    return out2d[:R, :T].reshape(B, F, T)


def ts_stddev_ref(x, min_w: int, stride: int):
    """Vectorized pure-JAX reference mirroring the PyTorch loop (two-pass)."""
    B, F, S = x.shape
    T = (S - min_w) // stride + 1
    xf = x.astype(jnp.float32)
    idx = jnp.arange(T)[:, None] * stride + jnp.arange(min_w)[None, :]  # (T, min)
    seg = xf[:, :, idx]                                                 # (B,F,T,min)
    mean = seg.mean(axis=-1, keepdims=True)
    c = seg - mean
    return jnp.sqrt((c * c).sum(axis=-1) / (min_w - 1))


if __name__ == "__main__":
    key = jax.random.PRNGKey(0)
    k2, k3 = jax.random.split(key)

    # Test 1: module-sized small case, TsStddev(min=5, stride=2).
    min_w, stride = 5, 2
    B, F, S = 2, 4, 16
    x = jax.random.normal(key, (B, F, S), dtype=jnp.float32)
    out = jax.block_until_ready(ts_stddev(x, min_w, stride))
    ref = ts_stddev_ref(x, min_w, stride)
    assert out.shape == (B, F, (S - min_w) // stride + 1)
    assert jnp.allclose(out, ref, atol=1e-5, rtol=1e-5), "test1 mismatch"

    # Test 2: multiple T tiles, band crossing, non-zero mean (exercises centering).
    min_w2, stride2 = 20, 1
    x2 = 3.0 + jax.random.normal(k2, (2, 3, 300), dtype=jnp.float32)
    out2 = jax.block_until_ready(ts_stddev(x2, min_w2, stride2))
    ref2 = ts_stddev_ref(x2, min_w2, stride2)
    assert jnp.allclose(out2, ref2, atol=1e-4, rtol=1e-4), "test2 mismatch"

    # Test 3: more rows than one row tile (exercises the R grid axis).
    x3 = jax.random.normal(k3, (8, 17, 64), dtype=jnp.float32)
    out3 = jax.block_until_ready(ts_stddev(x3, 5, 2))
    ref3 = ts_stddev_ref(x3, 5, 2)
    assert jnp.allclose(out3, ref3, atol=1e-5, rtol=1e-5), "test3 mismatch"

    # Test 4: optional bf16 MXU fast path (looser tolerance).
    out4 = jax.block_until_ready(ts_stddev(x3, 5, 2, use_bf16_matmul=True))
    assert jnp.allclose(out4, ref3, atol=2e-2, rtol=2e-2), "bf16 path mismatch"

    print("KERNEL_OK")
</pallas_src>

<mosaic_0001>
module attributes {stable_mosaic.version = 11 : i64} {
  func.func @kernel(%arg0: i32, %arg1: i32, %arg2: memref<128x256xf32, #tpu.memory_space<vmem>>, %arg3: memref<128x128xf32, #tpu.memory_space<vmem>>, %arg4: memref<384x128xf32, #tpu.memory_space<vmem>>, %arg5: memref<128x128xf32, #tpu.memory_space<vmem>>) attributes {dimension_semantics = [#tpu.dimension_semantics<parallel>, #tpu.dimension_semantics<parallel>], iteration_bounds = array<i64: 1, 1>, scalar_prefetch = 0 : i64, scratch_operands = 0 : i64, tpu.core_type = #tpu.core_type<tc>, window_params = [{transform_indices = @transform_0, window_bounds = array<i64: 128, 256>}, {transform_indices = @transform_1, window_bounds = array<i64: 128, 128>}, {pipeline_mode = #tpu.pipeline_mode<synchronous>, transform_indices = @transform_2, window_bounds = array<i64: 384, 128>}, {transform_indices = @transform_3, window_bounds = array<i64: 128, 128>}]} {
    %c0 = arith.constant 0 : index
    %c0_0 = arith.constant 0 : index
    %0 = vector.load %arg2[%c0, %c0_0] : memref<128x256xf32, #tpu.memory_space<vmem>>, vector<128x256xf32>
    %c0_1 = arith.constant 0 : index
    %c0_2 = arith.constant 0 : index
    %1 = vector.load %arg3[%c0_1, %c0_2] : memref<128x128xf32, #tpu.memory_space<vmem>>, vector<128x128xf32>
    %2 = tpu.concatenate %0, %1 in 1 : vector<128x256xf32>, vector<128x128xf32> -> vector<128x384xf32>
    %cst = arith.constant dense<0.000000e+00> : vector<128xf32>
    %3 = vector.multi_reduction <add>, %2, %cst [1] : vector<128x384xf32> to vector<128xf32>
    %4 = vector.shape_cast %3 : vector<128xf32> to vector<128x1xf32>
    %cst_3 = arith.constant 3.840000e+02 : f32
    %5 = vector.broadcast %cst_3 : f32 to vector<128x1xf32>
    %6 = arith.divf %4, %5 : vector<128x1xf32>
    %7 = vector.broadcast %6 : vector<128x1xf32> to vector<128x384xf32>
    %8 = arith.subf %2, %7 : vector<128x384xf32>
    %9 = arith.mulf %8, %8 : vector<128x384xf32>
    %10 = tpu.concatenate %8, %9 in 0 : vector<128x384xf32>, vector<128x384xf32> -> vector<256x384xf32>
    %c0_4 = arith.constant 0 : index
    %c0_5 = arith.constant 0 : index
    %11 = vector.load %arg4[%c0_4, %c0_5] : memref<384x128xf32, #tpu.memory_space<vmem>>, vector<384x128xf32>
    %cst_6 = arith.constant dense<0.000000e+00> : vector<256x128xf32>
    %12 = tpu.matmul %10, %11, %cst_6 {dimension_numbers = #tpu.dot_dimension_numbers<[1], [0], [0], [1], [0, 0, 1, 1], [], []>} : vector<256x384xf32>, vector<384x128xf32>, vector<256x128xf32> -> vector<256x128xf32>
    %13 = vector.extract_strided_slice %12 {offsets = [0, 0], sizes = [128, 128], strides = [1, 1]} : vector<256x128xf32> to vector<128x128xf32>
    %14 = vector.extract_strided_slice %12 {offsets = [128, 0], sizes = [128, 128], strides = [1, 1]} : vector<256x128xf32> to vector<128x128xf32>
    %15 = arith.mulf %13, %13 : vector<128x128xf32>
    %cst_7 = arith.constant 2.000000e-01 : f32
    %16 = vector.broadcast %cst_7 : f32 to vector<128x128xf32>
    %17 = arith.mulf %15, %16 : vector<128x128xf32>
    %18 = arith.subf %14, %17 : vector<128x128xf32>
    %cst_8 = arith.constant 2.500000e-01 : f32
    %19 = vector.broadcast %cst_8 : f32 to vector<128x128xf32>
    %20 = arith.mulf %18, %19 : vector<128x128xf32>
    %cst_9 = arith.constant 0.000000e+00 : f32
    %21 = vector.broadcast %cst_9 : f32 to vector<128x128xf32>
    %22 = arith.maximumf %20, %21 : vector<128x128xf32>
    %23 = math.sqrt %22 : vector<128x128xf32>
    %c0_10 = arith.constant 0 : index
    %c0_11 = arith.constant 0 : index
    %24 = vector.load %arg5[%c0_10, %c0_11] : memref<128x128xf32, #tpu.memory_space<vmem>>, vector<128x128xf32>
    tpu.vector_store %arg5[%c0_10, %c0_11], %23 {strides = array<i32>} : memref<128x128xf32, #tpu.memory_space<vmem>>, vector<128x128xf32>,
    return
  }
  func.func @transform_0(%arg0: i32, %arg1: i32) -> (i32, i32) {
    %c0_i32 = arith.constant 0 : i32
    return %arg0, %arg1 : i32, i32
  }
  func.func @transform_1(%arg0: i32, %arg1: i32) -> (i32, i32) {
    %c1_i32 = arith.constant 1 : i32
    %0 = arith.addi %arg1, %c1_i32 : i32
    %c2_i32 = arith.constant 2 : i32
    %1 = arith.muli %0, %c2_i32 : i32
    %c0_i32 = arith.constant 0 : i32
    return %arg0, %1 : i32, i32
  }
  func.func @transform_2(%arg0: i32, %arg1: i32) -> (i32, i32) {
    %c0_i32 = arith.constant 0 : i32
    %c0_i32_0 = arith.constant 0 : i32
    %c0_i32_1 = arith.constant 0 : i32
    return %c0_i32, %c0_i32_0 : i32, i32
  }
  func.func @transform_3(%arg0: i32, %arg1: i32) -> (i32, i32) {
    %c0_i32 = arith.constant 0 : i32
    return %arg0, %arg1 : i32, i32
  }
}

</mosaic_0001>

<llo_original>
// kernel: tpu_custom_call.1
$region0: #{tpu_custom_call.1}
  #allocation0 [shape = 'u32[]', space=smem, size = 0x4, offset = 0x4, fixed_abs, tag = 'smem constant byte address 0x4 - core index']
  #allocation1 [shape = 'u32[144,128]{1,0:T(1,128)}', space=vmem, size = 0x12000, scoped, tag = 'internal scratch']
  %s0 = inlined_call_operand.hbm [shape: f32[128,512], index: 0, kind: input, shape index: {}]
  %s1 = inlined_call_operand.hbm [shape: f32[128,512], index: 1, kind: input, shape index: {}]
  %s2 = inlined_call_operand.hbm [shape: f32[384,128], index: 2, kind: input, shape index: {}]
  %s3 = inlined_call_operand.hbm [shape: f32[128,128], index: 3, kind: output, shape index: {}]
  %s4 = sld [smem:[#allocation0]]
  $region34: #{tpu_custom_call.1} parent=0
    _
  %s6 = ssub.s32 1, %s4
  %s7 = scalar_select 0, %s6, %s4
  $region1: #{tpu_custom_call.1} parent=0
    #allocation2 [shape = 'u8[131072]{0}', space=vmem, size = 0x20000, scoped, tag = 'input window, operand 0, single buffered']
    #allocation3 [shape = 's32[1]{0}', space=sflag, size = 0x4, scoped, tag = 'scoped memory for tpu_custom_call.1']
    #allocation4 [shape = 's32[1]{0}', space=sflag, size = 0x4, scoped, tag = 'scoped memory for tpu_custom_call.1']
    #allocation5 [shape = 'u8[65536]{0}', space=vmem, size = 0x10000, scoped, tag = 'input window, operand 1, single buffered']
    #allocation6 [shape = 's32[1]{0}', space=sflag, size = 0x4, scoped, tag = 'scoped memory for tpu_custom_call.1']
    #allocation7 [shape = 'u8[196608]{0}', space=vmem, size = 0x30000, scoped, tag = 'input window, operand 2, single buffered']
    #allocation8 [shape = 'u8[65536]{0}', space=vmem, size = 0x10000, scoped, tag = 'output window, operand 0, single buffered']
    %8 = vsyncpa [#allocation3], 0
    %9 = vsyncpa [#allocation6], 0
    %10 = vsyncpa [#allocation4], 0
    // Predicated region
    $region2: #{tpu_custom_call.1} parent=1 // pred_check
      _
    $region3: #{tpu_custom_call.1} parent=1 // pred_check_branch
      %12 = sbr.rel (0) target = $region5
    $region4: #{tpu_custom_call.1} parent=1 // pred_region
      %s14 = ssub.s32 4096, 4096
      %15 = vsyncadd [#allocation3], %s14
      %s16 = sshll.u32 [#allocation2], 4
      %s17 = int_to_ptr.vmem [resolvable:$true] %s16
      %22 = dma.hbm_to_vmem [thread:$0]  %s0, 4096, %s17, [#allocation3], 512, 256, 16
    $region5: #{tpu_custom_call.1} parent=1 // pred_fallthru
      _
    // Predicated region
    $region6: #{tpu_custom_call.1} parent=1 // pred_check
      _
    $region7: #{tpu_custom_call.1} parent=1 // pred_check_branch
      %24 = sbr.rel (0) target = $region9
    $region8: #{tpu_custom_call.1} parent=1 // pred_region
      %s25 = sadd.s32 0, 1
      %s26 = smul.u32 %s25, 2
      %s28 = ssub.s32 2048, 2048
      %29 = vsyncadd [#allocation6], %s28
      %s30 = smul.addr %s26, 128
      %s31 = scalar_lea.hbm %s1, %s30
      %s32 = sshll.u32 [#allocation5], 4
      %s33 = int_to_ptr.vmem [resolvable:$true] %s32
      %38 = dma.hbm_to_vmem [thread:$0]  %s31, 2048, %s33, [#allocation6], 512, 128, 8
    $region9: #{tpu_custom_call.1} parent=1 // pred_fallthru
      _
    // Predicated region
    $region10: #{tpu_custom_call.1} parent=1 // pred_check
      _
    $region11: #{tpu_custom_call.1} parent=1 // pred_check_branch
      %40 = sbr.rel (0) target = $region13
    $region12: #{tpu_custom_call.1} parent=1 // pred_region
      %s42 = ssub.s32 6144, 6144
      %43 = vsyncadd [#allocation6], %s42
      %s44 = sshll.u32 [#allocation7], 4
      %s45 = int_to_ptr.vmem [resolvable:$true] %s44
      %50 = dma.hbm_to_vmem [thread:$0]  %s2, 6144, %s45, [#allocation6], 128, 128, 8
    $region13: #{tpu_custom_call.1} parent=1 // pred_fallthru
      _
    // Predicated region
    $region14: #{tpu_custom_call.1} parent=1 // pred_check
      _
    $region15: #{tpu_custom_call.1} parent=1 // pred_check_branch
      %52 = sbr.rel (0) target = $region17
    $region16: #{tpu_custom_call.1} parent=1 // pred_region
      %53 = dma.done [#allocation3], 4096
    $region17: #{tpu_custom_call.1} parent=1 // pred_fallthru
      _
    // Predicated region
    $region18: #{tpu_custom_call.1} parent=1 // pred_check
      _
    $region19: #{tpu_custom_call.1} parent=1 // pred_check_branch
      %55 = sbr.rel (0) target = $region21
    $region20: #{tpu_custom_call.1} parent=1 // pred_region
      %56 = dma.done [#allocation6], 2048
    $region21: #{tpu_custom_call.1} parent=1 // pred_fallthru
      _
    // Predicated region
    $region22: #{tpu_custom_call.1} parent=1 // pred_check
      _
    $region23: #{tpu_custom_call.1} parent=1 // pred_check_branch
      %58 = sbr.rel (0) target = $region25
    $region24: #{tpu_custom_call.1} parent=1 // pred_region
      %59 = dma.done [#allocation6], 6144
    $region25: #{tpu_custom_call.1} parent=1 // pred_fallthru
      _
    %s60 = sadd.s32 0, 1
    %s61 = smul.u32 %s60, 2
    %v62 = vld [vmem:[#allocation2] sm:$0xff]
    %v63 = vld [vmem:[#allocation2 + $0x8] sm:$0xff]
    %v64 = vld [vmem:[#allocation2 + $0x10] sm:$0xff]
    %v65 = vld [vmem:[#allocation2 + $0x18] sm:$0xff]
    %v66 = vld [vmem:[#allocation2 + $0x20] sm:$0xff]
    %v67 = vld [vmem:[#allocation2 + $0x28] sm:$0xff]
    %v68 = vld [vmem:[#allocation2 + $0x30] sm:$0xff]
    %v69 = vld [vmem:[#allocation2 + $0x38] sm:$0xff]
    %v70 = vld [vmem:[#allocation2 + $0x40] sm:$0xff]
    %v71 = vld [vmem:[#allocation2 + $0x48] sm:$0xff]
    %v72 = vld [vmem:[#allocation2 + $0x50] sm:$0xff]
    %v73 = vld [vmem:[#allocation2 + $0x58] sm:$0xff]
    %v74 = vld [vmem:[#allocation2 + $0x60] sm:$0xff]
    %v75 = vld [vmem:[#allocation2 + $0x68] sm:$0xff]
    %v76 = vld [vmem:[#allocation2 + $0x70] sm:$0xff]
    %v77 = vld [vmem:[#allocation2 + $0x78] sm:$0xff]
    %v78 = vld [vmem:[#allocation2 + $0x80] sm:$0xff]
    %v79 = vld [vmem:[#allocation2 + $0x88] sm:$0xff]
    %v80 = vld [vmem:[#allocation2 + $0x90] sm:$0xff]
    %v81 = vld [vmem:[#allocation2 + $0x98] sm:$0xff]
    %v82 = vld [vmem:[#allocation2 + $0xa0] sm:$0xff]
    %v83 = vld [vmem:[#allocation2 + $0xa8] sm:$0xff]
    %v84 = vld [vmem:[#allocation2 + $0xb0] sm:$0xff]
    %v85 = vld [vmem:[#allocation2 + $0xb8] sm:$0xff]
    %v86 = vld [vmem:[#allocation2 + $0xc0] sm:$0xff]
    %v87 = vld [vmem:[#allocation2 + $0xc8] sm:$0xff]
    %v88 = vld [vmem:[#allocation2 + $0xd0] sm:$0xff]
    %v89 = vld [vmem:[#allocation2 + $0xd8] sm:$0xff]
    %v90 = vld [vmem:[#allocation2 + $0xe0] sm:$0xff]
    %v91 = vld [vmem:[#allocation2 + $0xe8] sm:$0xff]
    %v92 = vld [vmem:[#allocation2 + $0xf0] sm:$0xff]
    %v93 = vld [vmem:[#allocation2 + $0xf8] sm:$0xff]
    %v94 = vld [vmem:[#allocation5] sm:$0xff]
    %v95 = vld [vmem:[#allocation5 + $0x8] sm:$0xff]
    %v96 = vld [vmem:[#allocation5 + $0x10] sm:$0xff]
    %v97 = vld [vmem:[#allocation5 + $0x18] sm:$0xff]
    %v98 = vld [vmem:[#allocation5 + $0x20] sm:$0xff]
    %v99 = vld [vmem:[#allocation5 + $0x28] sm:$0xff]
    %v100 = vld [vmem:[#allocation5 + $0x30] sm:$0xff]
    %v101 = vld [vmem:[#allocation5 + $0x38] sm:$0xff]
    %v102 = vld [vmem:[#allocation5 + $0x40] sm:$0xff]
    %v103 = vld [vmem:[#allocation5 + $0x48] sm:$0xff]
    %v104 = vld [vmem:[#allocation5 + $0x50] sm:$0xff]
    %v105 = vld [vmem:[#allocation5 + $0x58] sm:$0xff]
    %v106 = vld [vmem:[#allocation5 + $0x60] sm:$0xff]
    %v107 = vld [vmem:[#allocation5 + $0x68] sm:$0xff]
    %v108 = vld [vmem:[#allocation5 + $0x70] sm:$0xff]
    %v109 = vld [vmem:[#allocation5 + $0x78] sm:$0xff]
    %v110 = vadd.f32 %v62, %v63
    %v111 = vadd.f32 %v110, %v94
    %112 = vadd.xlane.f32.xlu0 %v111
    %v113 = vpop.xlane.xlu0 %112
    %v114 = vadd.f32 %v64, %v65
    %v115 = vadd.f32 %v114, %v95
    %116 = vadd.xlane.f32.xlu0 %v115
    %v117 = vpop.xlane.xlu0 %116
    %v118 = vadd.f32 %v66, %v67
    %v119 = vadd.f32 %v118, %v96
    %120 = vadd.xlane.f32.xlu0 %v119
    %v121 = vpop.xlane.xlu0 %120
    %v122 = vadd.f32 %v68, %v69
    %v123 = vadd.f32 %v122, %v97
    %124 = vadd.xlane.f32.xlu0 %v123
    %v125 = vpop.xlane.xlu0 %124
    %v126 = vadd.f32 %v70, %v71
    %v127 = vadd.f32 %v126, %v98
    %128 = vadd.xlane.f32.xlu0 %v127
    %v129 = vpop.xlane.xlu0 %128
    %v130 = vadd.f32 %v72, %v73
    %v131 = vadd.f32 %v130, %v99
    %132 = vadd.xlane.f32.xlu0 %v131
    %v133 = vpop.xlane.xlu0 %132
    %v134 = vadd.f32 %v74, %v75
    %v135 = vadd.f32 %v134, %v100
    %136 = vadd.xlane.f32.xlu0 %v135
    %v137 = vpop.xlane.xlu0 %136
    %v138 = vadd.f32 %v76, %v77
    %v139 = vadd.f32 %v138, %v101
    %140 = vadd.xlane.f32.xlu0 %v139
    %v141 = vpop.xlane.xlu0 %140
    %v142 = vadd.f32 %v78, %v79
    %v143 = vadd.f32 %v142, %v102
    %144 = vadd.xlane.f32.xlu0 %v143
    %v145 = vpop.xlane.xlu0 %144
    %v146 = vadd.f32 %v80, %v81
    %v147 = vadd.f32 %v146, %v103
    %148 = vadd.xlane.f32.xlu0 %v147
    %v149 = vpop.xlane.xlu0 %148
    %v150 = vadd.f32 %v82, %v83
    %v151 = vadd.f32 %v150, %v104
    %152 = vadd.xlane.f32.xlu0 %v151
    %v153 = vpop.xlane.xlu0 %152
    %v154 = vadd.f32 %v84, %v85
    %v155 = vadd.f32 %v154, %v105
    %156 = vadd.xlane.f32.xlu0 %v155
    %v157 = vpop.xlane.xlu0 %156
    %v158 = vadd.f32 %v86, %v87
    %v159 = vadd.f32 %v158, %v106
    %160 = vadd.xlane.f32.xlu0 %v159
    %v161 = vpop.xlane.xlu0 %160
    %v162 = vadd.f32 %v88, %v89
    %v163 = vadd.f32 %v162, %v107
    %164 = vadd.xlane.f32.xlu0 %v163
    %v165 = vpop.xlane.xlu0 %164
    %v166 = vadd.f32 %v90, %v91
    %v167 = vadd.f32 %v166, %v108
    %168 = vadd.xlane.f32.xlu0 %v167
    %v169 = vpop.xlane.xlu0 %168
    %v170 = vadd.f32 %v92, %v93
    %v171 = vadd.f32 %v170, %v109
    %172 = vadd.xlane.f32.xlu0 %v171
    %v173 = vpop.xlane.xlu0 %172
    %v174 = vrcp.pop 384.0
    %v175 = vmul.f32 %v113, %v174
    %v176 = vmul.f32 %v117, %v174
    %v177 = vmul.f32 %v121, %v174
    %v178 = vmul.f32 %v125, %v174
    %v179 = vmul.f32 %v129, %v174
    %v180 = vmul.f32 %v133, %v174
    %v181 = vmul.f32 %v137, %v174
    %v182 = vmul.f32 %v141, %v174
    %v183 = vmul.f32 %v145, %v174
    %v184 = vmul.f32 %v149, %v174
    %v185 = vmul.f32 %v153, %v174
    %v186 = vmul.f32 %v157, %v174
    %v187 = vmul.f32 %v161, %v174
    %v188 = vmul.f32 %v165, %v174
    %v189 = vmul.f32 %v169, %v174
    %v190 = vmul.f32 %v173, %v174
    %v191 = vsub.f32 %v62, %v175
    %v192 = vsub.f32 %v63, %v175
    %v193 = vsub.f32 %v94, %v175
    %v194 = vsub.f32 %v64, %v176
    %v195 = vsub.f32 %v65, %v176
    %v196 = vsub.f32 %v95, %v176
    %v197 = vsub.f32 %v66, %v177
    %v198 = vsub.f32 %v67, %v177
    %v199 = vsub.f32 %v96, %v177
    %v200 = vsub.f32 %v68, %v178
    %v201 = vsub.f32 %v69, %v178
    %v202 = vsub.f32 %v97, %v178
    %v203 = vsub.f32 %v70, %v179
    %v204 = vsub.f32 %v71, %v179
    %v205 = vsub.f32 %v98, %v179
    %v206 = vsub.f32 %v72, %v180
    %v207 = vsub.f32 %v73, %v180
    %v208 = vsub.f32 %v99, %v180
    %v209 = vsub.f32 %v74, %v181
    %v210 = vsub.f32 %v75, %v181
    %v211 = vsub.f32 %v100, %v181
    %v212 = vsub.f32 %v76, %v182
    %v213 = vsub.f32 %v77, %v182
    %v214 = vsub.f32 %v101, %v182
    %v215 = vsub.f32 %v78, %v183
    %v216 = vsub.f32 %v79, %v183
    %v217 = vsub.f32 %v102, %v183
    %v218 = vsub.f32 %v80, %v184
    %v219 = vsub.f32 %v81, %v184
    %v220 = vsub.f32 %v103, %v184
    %v221 = vsub.f32 %v82, %v185
    %v222 = vsub.f32 %v83, %v185
    %v223 = vsub.f32 %v104, %v185
    %v224 = vsub.f32 %v84, %v186
    %v225 = vsub.f32 %v85, %v186
    %v226 = vsub.f32 %v105, %v186
    %v227 = vsub.f32 %v86, %v187
    %v228 = vsub.f32 %v87, %v187
    %v229 = vsub.f32 %v106, %v187
    %v230 = vsub.f32 %v88, %v188
    %v231 = vsub.f32 %v89, %v188
    %v232 = vsub.f32 %v107, %v188
    %v233 = vsub.f32 %v90, %v189
    %v234 = vsub.f32 %v91, %v189
    %v235 = vsub.f32 %v108, %v189
    %v236 = vsub.f32 %v92, %v190
    %v237 = vsub.f32 %v93, %v190
    %v238 = vsub.f32 %v109, %v190
    %v239 = vmul.f32 %v191, %v191
    %v240 = vmul.f32 %v192, %v192
    %v241 = vmul.f32 %v193, %v193
    %v242 = vmul.f32 %v194, %v194
    %v243 = vmul.f32 %v195, %v195
    %v244 = vmul.f32 %v196, %v196
    %v245 = vmul.f32 %v197, %v197
    %v246 = vmul.f32 %v198, %v198
    %v247 = vmul.f32 %v199, %v199
    %v248 = vmul.f32 %v200, %v200
    %v249 = vmul.f32 %v201, %v201
    %v250 = vmul.f32 %v202, %v202
    %v251 = vmul.f32 %v203, %v203
    %v252 = vmul.f32 %v204, %v204
    %v253 = vmul.f32 %v205, %v205
    %v254 = vmul.f32 %v206, %v206
    %v255 = vmul.f32 %v207, %v207
    %v256 = vmul.f32 %v208, %v208
    %v257 = vmul.f32 %v209, %v209
    %v258 = vmul.f32 %v210, %v210
    %v259 = vmul.f32 %v211, %v211
    %v260 = vmul.f32 %v212, %v212
    %v261 = vmul.f32 %v213, %v213
    %v262 = vmul.f32 %v214, %v214
    %v263 = vmul.f32 %v215, %v215
    %v264 = vmul.f32 %v216, %v216
    %v265 = vmul.f32 %v217, %v217
    %v266 = vmul.f32 %v218, %v218
    %v267 = vmul.f32 %v219, %v219
    %v268 = vmul.f32 %v220, %v220
    %v269 = vmul.f32 %v221, %v221
    %v270 = vmul.f32 %v222, %v222
    %v271 = vmul.f32 %v223, %v223
    %v272 = vmul.f32 %v224, %v224
    %v273 = vmul.f32 %v225, %v225
    %v274 = vmul.f32 %v226, %v226
    %v275 = vmul.f32 %v227, %v227
    %v276 = vmul.f32 %v228, %v228
    %v277 = vmul.f32 %v229, %v229
    %v278 = vmul.f32 %v230, %v230
    %v279 = vmul.f32 %v231, %v231
    %v280 = vmul.f32 %v232, %v232
    %v281 = vmul.f32 %v233, %v233
    %v282 = vmul.f32 %v234, %v234
    %v283 = vmul.f32 %v235, %v235
    %v284 = vmul.f32 %v236, %v236
    %v285 = vmul.f32 %v237, %v237
    %v286 = vmul.f32 %v238, %v238
    %v287 = vld [vmem:[#allocation7] sm:$0xff]
    %v288 = vld [vmem:[#allocation7 + $0x8] sm:$0xff]
    %v289 = vld [vmem:[#allocation7 + $0x10] sm:$0xff]
    %v290 = vld [vmem:[#allocation7 + $0x18] sm:$0xff]
    %v291 = vld [vmem:[#allocation7 + $0x20] sm:$0xff]
    %v292 = vld [vmem:[#allocation7 + $0x28] sm:$0xff]
    %v293 = vld [vmem:[#allocation7 + $0x30] sm:$0xff]
    %v294 = vld [vmem:[#allocation7 + $0x38] sm:$0xff]
    %v295 = vld [vmem:[#allocation7 + $0x40] sm:$0xff]
    %v296 = vld [vmem:[#allocation7 + $0x48] sm:$0xff]
    %v297 = vld [vmem:[#allocation7 + $0x50] sm:$0xff]
    %v298 = vld [vmem:[#allocation7 + $0x58] sm:$0xff]
    %v299 = vld [vmem:[#allocation7 + $0x60] sm:$0xff]
    %v300 = vld [vmem:[#allocation7 + $0x68] sm:$0xff]
    %v301 = vld [vmem:[#allocation7 + $0x70] sm:$0xff]
    %v302 = vld [vmem:[#allocation7 + $0x78] sm:$0xff]
    %v303 = vld [vmem:[#allocation7 + $0x80] sm:$0xff]
    %v304 = vld [vmem:[#allocation7 + $0x88] sm:$0xff]
    %v305 = vld [vmem:[#allocation7 + $0x90] sm:$0xff]
    %v306 = vld [vmem:[#allocation7 + $0x98] sm:$0xff]
    %v307 = vld [vmem:[#allocation7 + $0xa0] sm:$0xff]
    %v308 = vld [vmem:[#allocation7 + $0xa8] sm:$0xff]
    %v309 = vld [vmem:[#allocation7 + $0xb0] sm:$0xff]
    %v310 = vld [vmem:[#allocation7 + $0xb8] sm:$0xff]
    %v311 = vld [vmem:[#allocation7 + $0xc0] sm:$0xff]
    %v312 = vld [vmem:[#allocation7 + $0xc8] sm:$0xff]
    %v313 = vld [vmem:[#allocation7 + $0xd0] sm:$0xff]
    %v314 = vld [vmem:[#allocation7 + $0xd8] sm:$0xff]
    %v315 = vld [vmem:[#allocation7 + $0xe0] sm:$0xff]
    %v316 = vld [vmem:[#allocation7 + $0xe8] sm:$0xff]
    %v317 = vld [vmem:[#allocation7 + $0xf0] sm:$0xff]
    %v318 = vld [vmem:[#allocation7 + $0xf8] sm:$0xff]
    %v319 = vld [vmem:[#allocation7 + $0x100] sm:$0xff]
    %v320 = vld [vmem:[#allocation7 + $0x108] sm:$0xff]
    %v321 = vld [vmem:[#allocation7 + $0x110] sm:$0xff]
    %v322 = vld [vmem:[#allocation7 + $0x118] sm:$0xff]
    %v323 = vld [vmem:[#allocation7 + $0x120] sm:$0xff]
    %v324 = vld [vmem:[#allocation7 + $0x128] sm:$0xff]
    %v325 = vld [vmem:[#allocation7 + $0x130] sm:$0xff]
    %v326 = vld [vmem:[#allocation7 + $0x138] sm:$0xff]
    %v327 = vld [vmem:[#allocation7 + $0x140] sm:$0xff]
    %v328 = vld [vmem:[#allocation7 + $0x148] sm:$0xff]
    %v329 = vld [vmem:[#allocation7 + $0x150] sm:$0xff]
    %v330 = vld [vmem:[#allocation7 + $0x158] sm:$0xff]
    %v331 = vld [vmem:[#allocation7 + $0x160] sm:$0xff]
    %v332 = vld [vmem:[#allocation7 + $0x168] sm:$0xff]
    %v333 = vld [vmem:[#allocation7 + $0x170] sm:$0xff]
    %v334 = vld [vmem:[#allocation7 + $0x178] sm:$0xff]
    %335 = vmatprep.subr.mxu0 0.0
    %336 = vmatpush1.msra.mxu0 %v287
    %337 = vmatprep.subr.mxu0 0.0
    %338 = vmatpush1.msra.mxu0 %v288
    %339 = vmatprep.subr.mxu0 0.0
    %340 = vmatpush1.msra.mxu0 %v289
    %341 = vmatprep.subr.mxu0 0.0
    %342 = vmatpush1.msra.mxu0 %v290
    %343 = vmatprep.subr.mxu0 0.0
    %344 = vmatpush1.msra.mxu0 %v291
    %345 = vmatprep.subr.mxu0 0.0
    %346 = vmatpush1.msra.mxu0 %v292
    %347 = vmatprep.subr.mxu0 0.0
    %348 = vmatpush1.msra.mxu0 %v293
    %349 = vmatprep.subr.mxu0 0.0
    %350 = vmatpush1.msra.mxu0 %v294
    %351 = vmatprep.subr.mxu0 0.0
    %352 = vmatpush1.msra.mxu0 %v295
    %353 = vmatprep.subr.mxu0 0.0
    %354 = vmatpush1.msra.mxu0 %v296
    %355 = vmatprep.subr.mxu0 0.0
    %356 = vmatpush1.msra.mxu0 %v297
    %357 = vmatprep.subr.mxu0 0.0
    %358 = vmatpush1.msra.mxu0 %v298
    %359 = vmatprep.subr.mxu0 0.0
    %360 = vmatpush1.msra.mxu0 %v299
    %361 = vmatprep.subr.mxu0 0.0
    %362 = vmatpush1.msra.mxu0 %v300
    %363 = vmatprep.subr.mxu0 0.0
    %364 = vmatpush1.msra.mxu0 %v301
    %365 = vmatprep.subr.mxu0 0.0
    %366 = vmatpush1.msra.mxu0 %v302
    %367 = vmatprep.subr.mxu0 0.0
    %368 = vmatpush1.msra.mxu0 %v303
    %369 = vmatprep.subr.mxu0 0.0
    %370 = vmatpush1.msra.mxu0 %v304
    %371 = vmatprep.subr.mxu0 0.0
    %372 = vmatpush1.msra.mxu0 %v305
    %373 = vmatprep.subr.mxu0 0.0
    %374 = vmatpush1.msra.mxu0 %v306
    %375 = vmatprep.subr.mxu0 0.0
    %376 = vmatpush1.msra.mxu0 %v307
    %377 = vmatprep.subr.mxu0 0.0
    %378 = vmatpush1.msra.mxu0 %v308
    %379 = vmatprep.subr.mxu0 0.0
    %380 = vmatpush1.msra.mxu0 %v309
    %381 = vmatprep.subr.mxu0 0.0
    %382 = vmatpush1.msra.mxu0 %v310
    %383 = vmatprep.subr.mxu0 0.0
    %384 = vmatpush1.msra.mxu0 %v311
    %385 = vmatprep.subr.mxu0 0.0
    %386 = vmatpush1.msra.mxu0 %v312
    %387 = vmatprep.subr.mxu0 0.0
    %388 = vmatpush1.msra.mxu0 %v313
    %389 = vmatprep.subr.mxu0 0.0
    %390 = vmatpush1.msra.mxu0 %v314
    %391 = vmatprep.subr.mxu0 0.0
    %392 = vmatpush1.msra.mxu0 %v315
    %393 = vmatprep.subr.mxu0 0.0
    %394 = vmatpush1.msra.mxu0 %v316
    %395 = vmatprep.subr.mxu0 0.0
    %396 = vmatpush1.msra.mxu0 %v317
    %397 = vmatprep.subr.mxu0 0.0
    %398 = vmatpush1.msra.mxu0 %v318
    %399 = vmatprep.mubr.f32.mxu0 %v192
    %400 = vmatmul.mubr.f32.gmra.mrb[0].mxu0 %v191
    %v401 = vpop.f32.mrb[0].mxu0
    %v402 = vadd.f32 0.0, %v401
    %v403 = vpop.f32.mrb[0].mxu0
    %404 = vmatprep.mubr.f32.mxu0 %v195
    %405 = vmatmul.mubr.f32.gmra.mrb[0].mxu0 %v194
    %v406 = vpop.f32.mrb[0].mxu0
    %v407 = vadd.f32 0.0, %v406
    %v408 = vpop.f32.mrb[0].mxu0
    %409 = vmatprep.mubr.f32.mxu0 %v198
    %410 = vmatmul.mubr.f32.gmra.mrb[0].mxu0 %v197
    %v411 = vpop.f32.mrb[0].mxu0
    %v412 = vadd.f32 0.0, %v411
    %v413 = vpop.f32.mrb[0].mxu0
    %414 = vmatprep.mubr.f32.mxu0 %v201
    %415 = vmatmul.mubr.f32.gmra.mrb[0].mxu0 %v200
    %v416 = vpop.f32.mrb[0].mxu0
    %v417 = vadd.f32 0.0, %v416
    %v418 = vpop.f32.mrb[0].mxu0
    %419 = vmatprep.mubr.f32.mxu0 %v204
    %420 = vmatmul.mubr.f32.gmra.mrb[0].mxu0 %v203
    %v421 = vpop.f32.mrb[0].mxu0
    %v422 = vadd.f32 0.0, %v421
    %v423 = vpop.f32.mrb[0].mxu0
    %424 = vmatprep.mubr.f32.mxu0 %v207
    %425 = vmatmul.mubr.f32.gmra.mrb[0].mxu0 %v206
    %v426 = vpop.f32.mrb[0].mxu0
    %v427 = vadd.f32 0.0, %v426
    %v428 = vpop.f32.mrb[0].mxu0
    %429 = vmatprep.mubr.f32.mxu0 %v210
    %430 = vmatmul.mubr.f32.gmra.mrb[0].mxu0 %v209
    %v431 = vpop.f32.mrb[0].mxu0
    %v432 = vadd.f32 0.0, %v431
    %v433 = vpop.f32.mrb[0].mxu0
    %434 = vmatprep.mubr.f32.mxu0 %v213
    %435 = vmatmul.mubr.f32.gmra.mrb[0].mxu0 %v212
    %v436 = vpop.f32.mrb[0].mxu0
    %v437 = vadd.f32 0.0, %v436
    %v438 = vpop.f32.mrb[0].mxu0
    %439 = vmatprep.mubr.f32.mxu0 %v216
    %440 = vmatmul.mubr.f32.gmra.mrb[0].mxu0 %v215
    %v441 = vpop.f32.mrb[0].mxu0
    %v442 = vadd.f32 0.0, %v441
    %v443 = vpop.f32.mrb[0].mxu0
    %444 = vmatprep.mubr.f32.mxu0 %v219
    %445 = vmatmul.mubr.f32.gmra.mrb[0].mxu0 %v218
    %v446 = vpop.f32.mrb[0].mxu0
    %v447 = vadd.f32 0.0, %v446
    %v448 = vpop.f32.mrb[0].mxu0
    %449 = vmatprep.mubr.f32.mxu0 %v222
    %450 = vmatmul.mubr.f32.gmra.mrb[0].mxu0 %v221
    %v451 = vpop.f32.mrb[0].mxu0
    %v452 = vadd.f32 0.0, %v451
    %v453 = vpop.f32.mrb[0].mxu0
    %454 = vmatprep.mubr.f32.mxu0 %v225
    %455 = vmatmul.mubr.f32.gmra.mrb[0].mxu0 %v224
    %v456 = vpop.f32.mrb[0].mxu0
    %v457 = vadd.f32 0.0, %v456
    %v458 = vpop.f32.mrb[0].mxu0
    %459 = vmatprep.mubr.f32.mxu0 %v228
    %460 = vmatmul.mubr.f32.gmra.mrb[0].mxu0 %v227
    %v461 = vpop.f32.mrb[0].mxu0
    %v462 = vadd.f32 0.0, %v461
    %v463 = vpop.f32.mrb[0].mxu0
    %464 = vmatprep.mubr.f32.mxu0 %v231
    %465 = vmatmul.mubr.f32.gmra.mrb[0].mxu0 %v230
    %v466 = vpop.f32.mrb[0].mxu0
    %v467 = vadd.f32 0.0, %v466
    %v468 = vpop.f32.mrb[0].mxu0
    %469 = vmatprep.mubr.f32.mxu0 %v234
    %470 = vmatmul.mubr.f32.gmra.mrb[0].mxu0 %v233
    %v471 = vpop.f32.mrb[0].mxu0
    %v472 = vadd.f32 0.0, %v471
    %v473 = vpop.f32.mrb[0].mxu0
    %474 = vmatprep.mubr.f32.mxu0 %v237
    %475 = vmatmul.mubr.f32.gmra.mrb[0].mxu0 %v236
    %v476 = vpop.f32.mrb[0].mxu0
    %v477 = vadd.f32 0.0, %v476
    %v478 = vpop.f32.mrb[0].mxu0
    %479 = vmatprep.mubr.f32.mxu0 %v240
    %480 = vmatmul.mubr.f32.gmra.mrb[0].mxu0 %v239
    %v481 = vpop.f32.mrb[0].mxu0
    %v482 = vadd.f32 0.0, %v481
    %v483 = vpop.f32.mrb[0].mxu0
    %484 = vmatprep.mubr.f32.mxu0 %v243
    %485 = vmatmul.mubr.f32.gmra.mrb[0].mxu0 %v242
    %v486 = vpop.f32.mrb[0].mxu0
    %v487 = vadd.f32 0.0, %v486
    %v488 = vpop.f32.mrb[0].mxu0
    %489 = vmatprep.mubr.f32.mxu0 %v246
    %490 = vmatmul.mubr.f32.gmra.mrb[0].mxu0 %v245
    %v491 = vpop.f32.mrb[0].mxu0
    %v492 = vadd.f32 0.0, %v491
    %v493 = vpop.f32.mrb[0].mxu0
    %494 = vmatprep.mubr.f32.mxu0 %v249
    %495 = vmatmul.mubr.f32.gmra.mrb[0].mxu0 %v248
    %v496 = vpop.f32.mrb[0].mxu0
    %v497 = vadd.f32 0.0, %v496
    %v498 = vpop.f32.mrb[0].mxu0
    %499 = vmatprep.mubr.f32.mxu0 %v252
    %500 = vmatmul.mubr.f32.gmra.mrb[0].mxu0 %v251
    %v501 = vpop.f32.mrb[0].mxu0
    %v502 = vadd.f32 0.0, %v501
    %v503 = vpop.f32.mrb[0].mxu0
    %504 = vmatprep.mubr.f32.mxu0 %v255
    %505 = vmatmul.mubr.f32.gmra.mrb[0].mxu0 %v254
    %v506 = vpop.f32.mrb[0].mxu0
    %v507 = vadd.f32 0.0, %v506
    %v508 = vpop.f32.mrb[0].mxu0
    %509 = vmatprep.mubr.f32.mxu0 %v258
    %510 = vmatmul.mubr.f32.gmra.mrb[0].mxu0 %v257
    %v511 = vpop.f32.mrb[0].mxu0
    %v512 = vadd.f32 0.0, %v511
    %v513 = vpop.f32.mrb[0].mxu0
    %514 = vmatprep.mubr.f32.mxu0 %v261
    %515 = vmatmul.mubr.f32.gmra.mrb[0].mxu0 %v260
    %v516 = vpop.f32.mrb[0].mxu0
    %v517 = vadd.f32 0.0, %v516
    %v518 = vpop.f32.mrb[0].mxu0
    %519 = vmatprep.mubr.f32.mxu0 %v264
    %520 = vmatmul.mubr.f32.gmra.mrb[0].mxu0 %v263
    %v521 = vpop.f32.mrb[0].mxu0
    %v522 = vadd.f32 0.0, %v521
    %v523 = vpop.f32.mrb[0].mxu0
    %524 = vmatprep.mubr.f32.mxu0 %v267
    %525 = vmatmul.mubr.f32.gmra.mrb[0].mxu0 %v266
    %v526 = vpop.f32.mrb[0].mxu0
    %v527 = vadd.f32 0.0, %v526
    %v528 = vpop.f32.mrb[0].mxu0
    %529 = vmatprep.mubr.f32.mxu0 %v270
    %530 = vmatmul.mubr.f32.gmra.mrb[0].mxu0 %v269
    %v531 = vpop.f32.mrb[0].mxu0
    %v532 = vadd.f32 0.0, %v531
    %v533 = vpop.f32.mrb[0].mxu0
    %534 = vmatprep.mubr.f32.mxu0 %v273
    %535 = vmatmul.mubr.f32.gmra.mrb[0].mxu0 %v272
    %v536 = vpop.f32.mrb[0].mxu0
    %v537 = vadd.f32 0.0, %v536
    %v538 = vpop.f32.mrb[0].mxu0
    %539 = vmatprep.mubr.f32.mxu0 %v276
    %540 = vmatmul.mubr.f32.gmra.mrb[0].mxu0 %v275
    %v541 = vpop.f32.mrb[0].mxu0
    %v542 = vadd.f32 0.0, %v541
    %v543 = vpop.f32.mrb[0].mxu0
    %544 = vmatprep.mubr.f32.mxu0 %v279
    %545 = vmatmul.mubr.f32.gmra.mrb[0].mxu0 %v278
    %v546 = vpop.f32.mrb[0].mxu0
    %v547 = vadd.f32 0.0, %v546
    %v548 = vpop.f32.mrb[0].mxu0
    %549 = vmatprep.mubr.f32.mxu0 %v282
    %550 = vmatmul.mubr.f32.gmra.mrb[0].mxu0 %v281
    %v551 = vpop.f32.mrb[0].mxu0
    %v552 = vadd.f32 0.0, %v551
    %v553 = vpop.f32.mrb[0].mxu0
    %554 = vmatprep.mubr.f32.mxu0 %v285
    %555 = vmatmul.mubr.f32.gmra.mrb[0].mxu0 %v284
    %v556 = vpop.f32.mrb[0].mxu0
    %v557 = vadd.f32 0.0, %v556
    %v558 = vpop.f32.mrb[0].mxu0
    %559 = vdwg.mxu0
    %560 = vmatprep.subr.mxu0 0.0
    %561 = vmatpush1.msra.mxu0 %v319
    %562 = vmatprep.subr.mxu0 0.0
    %563 = vmatpush1.msra.mxu0 %v320
    %564 = vmatprep.subr.mxu0 0.0
    %565 = vmatpush1.msra.mxu0 %v321
    %566 = vmatprep.subr.mxu0 0.0
    %567 = vmatpush1.msra.mxu0 %v322
    %568 = vmatprep.subr.mxu0 0.0
    %569 = vmatpush1.msra.mxu0 %v323
    %570 = vmatprep.subr.mxu0 0.0
    %571 = vmatpush1.msra.mxu0 %v324
    %572 = vmatprep.subr.mxu0 0.0
    %573 = vmatpush1.msra.mxu0 %v325
    %574 = vmatprep.subr.mxu0 0.0
    %575 = vmatpush1.msra.mxu0 %v326
    %576 = vmatprep.subr.mxu0 0.0
    %577 = vmatpush1.msra.mxu0 %v327
    %578 = vmatprep.subr.mxu0 0.0
    %579 = vmatpush1.msra.mxu0 %v328
    %580 = vmatprep.subr.mxu0 0.0
    %581 = vmatpush1.msra.mxu0 %v329
    %582 = vmatprep.subr.mxu0 0.0
    %583 = vmatpush1.msra.mxu0 %v330
    %584 = vmatprep.subr.mxu0 0.0
    %585 = vmatpush1.msra.mxu0 %v331
    %586 = vmatprep.subr.mxu0 0.0
    %587 = vmatpush1.msra.mxu0 %v332
    %588 = vmatprep.subr.mxu0 0.0
    %589 = vmatpush1.msra.mxu0 %v333
    %590 = vmatprep.subr.mxu0 0.0
    %591 = vmatpush1.msra.mxu0 %v334
    %592 = vmatprep.subr.mxu0 0.0
    %593 = vmatpush1.msra.mxu0 0.0
    %594 = vmatprep.subr.mxu0 0.0
    %595 = vmatpush1.msra.mxu0 0.0
    %596 = vmatprep.subr.mxu0 0.0
    %597 = vmatpush1.msra.mxu0 0.0
    %598 = vmatprep.subr.mxu0 0.0
    %599 = vmatpush1.msra.mxu0 0.0
    %600 = vmatprep.subr.mxu0 0.0
    %601 = vmatpush1.msra.mxu0 0.0
    %602 = vmatprep.subr.mxu0 0.0
    %603 = vmatpush1.msra.mxu0 0.0
    %604 = vmatprep.subr.mxu0 0.0
    %605 = vmatpush1.msra.mxu0 0.0
    %606 = vmatprep.subr.mxu0 0.0
    %607 = vmatpush1.msra.mxu0 0.0
    %608 = vmatprep.subr.mxu0 0.0
    %609 = vmatpush1.msra.mxu0 0.0
    %610 = vmatprep.subr.mxu0 0.0
    %611 = vmatpush1.msra.mxu0 0.0
    %612 = vmatprep.subr.mxu0 0.0
    %613 = vmatpush1.msra.mxu0 0.0
    %614 = vmatprep.subr.mxu0 0.0
    %615 = vmatpush1.msra.mxu0 0.0
    %616 = vmatprep.subr.mxu0 0.0
    %617 = vmatpush1.msra.mxu0 0.0
    %618 = vmatprep.subr.mxu0 0.0
    %619 = vmatpush1.msra.mxu0 0.0
    %620 = vmatprep.subr.mxu0 0.0
    %621 = vmatpush1.msra.mxu0 0.0
    %622 = vmatprep.subr.mxu0 0.0
    %623 = vmatpush1.msra.mxu0 0.0
    %624 = vmatprep.mubr.f32.mxu0 0.0
    %625 = vmatmul.mubr.f32.gmra.mrb[0].mxu0 %v193
    %v626 = vpop.f32.mrb[0].mxu0
    %v627 = vadd.f32 %v402, %v626
    %v628 = vpop.f32.mrb[0].mxu0
    %629 = vmatprep.mubr.f32.mxu0 0.0
    %630 = vmatmul.mubr.f32.gmra.mrb[0].mxu0 %v196
    %v631 = vpop.f32.mrb[0].mxu0
    %v632 = vadd.f32 %v407, %v631
    %v633 = vpop.f32.mrb[0].mxu0
    %634 = vmatprep.mubr.f32.mxu0 0.0
    %635 = vmatmul.mubr.f32.gmra.mrb[0].mxu0 %v199
    %v636 = vpop.f32.mrb[0].mxu0
    %v637 = vadd.f32 %v412, %v636
    %v638 = vpop.f32.mrb[0].mxu0
    %639 = vmatprep.mubr.f32.mxu0 0.0
    %640 = vmatmul.mubr.f32.gmra.mrb[0].mxu0 %v202
    %v641 = vpop.f32.mrb[0].mxu0
    %v642 = vadd.f32 %v417, %v641
    %v643 = vpop.f32.mrb[0].mxu0
    %644 = vmatprep.mubr.f32.mxu0 0.0
    %645 = vmatmul.mubr.f32.gmra.mrb[0].mxu0 %v205
    %v646 = vpop.f32.mrb[0].mxu0
    %v647 = vadd.f32 %v422, %v646
    %v648 = vpop.f32.mrb[0].mxu0
    %649 = vmatprep.mubr.f32.mxu0 0.0
    %650 = vmatmul.mubr.f32.gmra.mrb[0].mxu0 %v208
    %v651 = vpop.f32.mrb[0].mxu0
    %v652 = vadd.f32 %v427, %v651
    %v653 = vpop.f32.mrb[0].mxu0
    %654 = vmatprep.mubr.f32.mxu0 0.0
    %655 = vmatmul.mubr.f32.gmra.mrb[0].mxu0 %v211
    %v656 = vpop.f32.mrb[0].mxu0
    %v657 = vadd.f32 %v432, %v656
    %v658 = vpop.f32.mrb[0].mxu0
    %659 = vmatprep.mubr.f32.mxu0 0.0
    %660 = vmatmul.mubr.f32.gmra.mrb[0].mxu0 %v214
    %v661 = vpop.f32.mrb[0].mxu0
    %v662 = vadd.f32 %v437, %v661
    %v663 = vpop.f32.mrb[0].mxu0
    %664 = vmatprep.mubr.f32.mxu0 0.0
    %665 = vmatmul.mubr.f32.gmra.mrb[0].mxu0 %v217
    %v666 = vpop.f32.mrb[0].mxu0
    %v667 = vadd.f32 %v442, %v666
    %v668 = vpop.f32.mrb[0].mxu0
    %669 = vmatprep.mubr.f32.mxu0 0.0
    %670 = vmatmul.mubr.f32.gmra.mrb[0].mxu0 %v220
    %v671 = vpop.f32.mrb[0].mxu0
    %v672 = vadd.f32 %v447, %v671
    %v673 = vpop.f32.mrb[0].mxu0
    %674 = vmatprep.mubr.f32.mxu0 0.0
    %675 = vmatmul.mubr.f32.gmra.mrb[0].mxu0 %v223
    %v676 = vpop.f32.mrb[0].mxu0
    %v677 = vadd.f32 %v452, %v676
    %v678 = vpop.f32.mrb[0].mxu0
    %679 = vmatprep.mubr.f32.mxu0 0.0
    %680 = vmatmul.mubr.f32.gmra.mrb[0].mxu0 %v226
    %v681 = vpop.f32.mrb[0].mxu0
    %v682 = vadd.f32 %v457, %v681
    %v683 = vpop.f32.mrb[0].mxu0
    %684 = vmatprep.mubr.f32.mxu0 0.0
    %685 = vmatmul.mubr.f32.gmra.mrb[0].mxu0 %v229
    %v686 = vpop.f32.mrb[0].mxu0
    %v687 = vadd.f32 %v462, %v686
    %v688 = vpop.f32.mrb[0].mxu0
    %689 = vmatprep.mubr.f32.mxu0 0.0
    %690 = vmatmul.mubr.f32.gmra.mrb[0].mxu0 %v232
    %v691 = vpop.f32.mrb[0].mxu0
    %v692 = vadd.f32 %v467, %v691
    %v693 = vpop.f32.mrb[0].mxu0
    %694 = vmatprep.mubr.f32.mxu0 0.0
    %695 = vmatmul.mubr.f32.gmra.mrb[0].mxu0 %v235
    %v696 = vpop.f32.mrb[0].mxu0
    %v697 = vadd.f32 %v472, %v696
    %v698 = vpop.f32.mrb[0].mxu0
    %699 = vmatprep.mubr.f32.mxu0 0.0
    %700 = vmatmul.mubr.f32.gmra.mrb[0].mxu0 %v238
    %v701 = vpop.f32.mrb[0].mxu0
    %v702 = vadd.f32 %v477, %v701
    %v703 = vpop.f32.mrb[0].mxu0
    %704 = vmatprep.mubr.f32.mxu0 0.0
    %705 = vmatmul.mubr.f32.gmra.mrb[0].mxu0 %v241
    %v706 = vpop.f32.mrb[0].mxu0
    %v707 = vadd.f32 %v482, %v706
    %v708 = vpop.f32.mrb[0].mxu0
    %709 = vmatprep.mubr.f32.mxu0 0.0
    %710 = vmatmul.mubr.f32.gmra.mrb[0].mxu0 %v244
    %v711 = vpop.f32.mrb[0].mxu0
    %v712 = vadd.f32 %v487, %v711
    %v713 = vpop.f32.mrb[0].mxu0
    %714 = vmatprep.mubr.f32.mxu0 0.0
    %715 = vmatmul.mubr.f32.gmra.mrb[0].mxu0 %v247
    %v716 = vpop.f32.mrb[0].mxu0
    %v717 = vadd.f32 %v492, %v716
    %v718 = vpop.f32.mrb[0].mxu0
    %719 = vmatprep.mubr.f32.mxu0 0.0
    %720 = vmatmul.mubr.f32.gmra.mrb[0].mxu0 %v250
    %v721 = vpop.f32.mrb[0].mxu0
    %v722 = vadd.f32 %v497, %v721
    %v723 = vpop.f32.mrb[0].mxu0
    %724 = vmatprep.mubr.f32.mxu0 0.0
    %725 = vmatmul.mubr.f32.gmra.mrb[0].mxu0 %v253
    %v726 = vpop.f32.mrb[0].mxu0
    %v727 = vadd.f32 %v502, %v726
    %v728 = vpop.f32.mrb[0].mxu0
    %729 = vmatprep.mubr.f32.mxu0 0.0
    %730 = vmatmul.mubr.f32.gmra.mrb[0].mxu0 %v256
    %v731 = vpop.f32.mrb[0].mxu0
    %v732 = vadd.f32 %v507, %v731
    %v733 = vpop.f32.mrb[0].mxu0
    %734 = vmatprep.mubr.f32.mxu0 0.0
    %735 = vmatmul.mubr.f32.gmra.mrb[0].mxu0 %v259
    %v736 = vpop.f32.mrb[0].mxu0
    %v737 = vadd.f32 %v512, %v736
    %v738 = vpop.f32.mrb[0].mxu0
    %739 = vmatprep.mubr.f32.mxu0 0.0
    %740 = vmatmul.mubr.f32.gmra.mrb[0].mxu0 %v262
    %v741 = vpop.f32.mrb[0].mxu0
    %v742 = vadd.f32 %v517, %v741
    %v743 = vpop.f32.mrb[0].mxu0
    %744 = vmatprep.mubr.f32.mxu0 0.0
    %745 = vmatmul.mubr.f32.gmra.mrb[0].mxu0 %v265
    %v746 = vpop.f32.mrb[0].mxu0
    %v747 = vadd.f32 %v522, %v746
    %v748 = vpop.f32.mrb[0].mxu0
    %749 = vmatprep.mubr.f32.mxu0 0.0
    %750 = vmatmul.mubr.f32.gmra.mrb[0].mxu0 %v268
    %v751 = vpop.f32.mrb[0].mxu0
    %v752 = vadd.f32 %v527, %v751
    %v753 = vpop.f32.mrb[0].mxu0
    %754 = vmatprep.mubr.f32.mxu0 0.0
    %755 = vmatmul.mubr.f32.gmra.mrb[0].mxu0 %v271
    %v756 = vpop.f32.mrb[0].mxu0
    %v757 = vadd.f32 %v532, %v756
    %v758 = vpop.f32.mrb[0].mxu0
    %759 = vmatprep.mubr.f32.mxu0 0.0
    %760 = vmatmul.mubr.f32.gmra.mrb[0].mxu0 %v274
    %v761 = vpop.f32.mrb[0].mxu0
    %v762 = vadd.f32 %v537, %v761
    %v763 = vpop.f32.mrb[0].mxu0
    %764 = vmatprep.mubr.f32.mxu0 0.0
    %765 = vmatmul.mubr.f32.gmra.mrb[0].mxu0 %v277
    %v766 = vpop.f32.mrb[0].mxu0
    %v767 = vadd.f32 %v542, %v766
    %v768 = vpop.f32.mrb[0].mxu0
    %769 = vmatprep.mubr.f32.mxu0 0.0
    %770 = vmatmul.mubr.f32.gmra.mrb[0].mxu0 %v280
    %v771 = vpop.f32.mrb[0].mxu0
    %v772 = vadd.f32 %v547, %v771
    %v773 = vpop.f32.mrb[0].mxu0
    %774 = vmatprep.mubr.f32.mxu0 0.0
    %775 = vmatmul.mubr.f32.gmra.mrb[0].mxu0 %v283
    %v776 = vpop.f32.mrb[0].mxu0
    %v777 = vadd.f32 %v552, %v776
    %v778 = vpop.f32.mrb[0].mxu0
    %779 = vmatprep.mubr.f32.mxu0 0.0
    %780 = vmatmul.mubr.f32.gmra.mrb[0].mxu0 %v286
    %v781 = vpop.f32.mrb[0].mxu0
    %v782 = vadd.f32 %v557, %v781
    %v783 = vpop.f32.mrb[0].mxu0
    %784 = vdwg.mxu0
    %v785 = vmul.f32 %v627, %v627
    %v786 = vmul.f32 %v632, %v632
    %v787 = vmul.f32 %v637, %v637
    %v788 = vmul.f32 %v642, %v642
    %v789 = vmul.f32 %v647, %v647
    %v790 = vmul.f32 %v652, %v652
    %v791 = vmul.f32 %v657, %v657
    %v792 = vmul.f32 %v662, %v662
    %v793 = vmul.f32 %v667, %v667
    %v794 = vmul.f32 %v672, %v672
    %v795 = vmul.f32 %v677, %v677
    %v796 = vmul.f32 %v682, %v682
    %v797 = vmul.f32 %v687, %v687
    %v798 = vmul.f32 %v692, %v692
    %v799 = vmul.f32 %v697, %v697
    %v800 = vmul.f32 %v702, %v702
    %v801 = vmul.f32 %v785, 0.2
    %v802 = vmul.f32 %v786, 0.2
    %v803 = vmul.f32 %v787, 0.2
    %v804 = vmul.f32 %v788, 0.2
    %v805 = vmul.f32 %v789, 0.2
    %v806 = vmul.f32 %v790, 0.2
    %v807 = vmul.f32 %v791, 0.2
    %v808 = vmul.f32 %v792, 0.2
    %v809 = vmul.f32 %v793, 0.2
    %v810 = vmul.f32 %v794, 0.2
    %v811 = vmul.f32 %v795, 0.2
    %v812 = vmul.f32 %v796, 0.2
    %v813 = vmul.f32 %v797, 0.2
    %v814 = vmul.f32 %v798, 0.2
    %v815 = vmul.f32 %v799, 0.2
    %v816 = vmul.f32 %v800, 0.2
    %v817 = vsub.f32 %v707, %v801
    %v818 = vsub.f32 %v712, %v802
    %v819 = vsub.f32 %v717, %v803
    %v820 = vsub.f32 %v722, %v804
    %v821 = vsub.f32 %v727, %v805
    %v822 = vsub.f32 %v732, %v806
    %v823 = vsub.f32 %v737, %v807
    %v824 = vsub.f32 %v742, %v808
    %v825 = vsub.f32 %v747, %v809
    %v826 = vsub.f32 %v752, %v810
    %v827 = vsub.f32 %v757, %v811
    %v828 = vsub.f32 %v762, %v812
    %v829 = vsub.f32 %v767, %v813
    %v830 = vsub.f32 %v772, %v814
    %v831 = vsub.f32 %v777, %v815
    %v832 = vsub.f32 %v782, %v816
    %v833 = vmul.f32 %v817, 0.25
    %v834 = vmul.f32 %v818, 0.25
    %v835 = vmul.f32 %v819, 0.25
    %v836 = vmul.f32 %v820, 0.25
    %v837 = vmul.f32 %v821, 0.25
    %v838 = vmul.f32 %v822, 0.25
    %v839 = vmul.f32 %v823, 0.25
    %v840 = vmul.f32 %v824, 0.25
    %v841 = vmul.f32 %v825, 0.25
    %v842 = vmul.f32 %v826, 0.25
    %v843 = vmul.f32 %v827, 0.25
    %v844 = vmul.f32 %v828, 0.25
    %v845 = vmul.f32 %v829, 0.25
    %v846 = vmul.f32 %v830, 0.25
    %v847 = vmul.f32 %v831, 0.25
    %v848 = vmul.f32 %v832, 0.25
    %v849 = vmax.f32 %v833, 0.0
    %v850 = vmax.f32 %v834, 0.0
    %v851 = vmax.f32 %v835, 0.0
    %v852 = vmax.f32 %v836, 0.0
    %v853 = vmax.f32 %v837, 0.0
    %v854 = vmax.f32 %v838, 0.0
    %v855 = vmax.f32 %v839, 0.0
    %v856 = vmax.f32 %v840, 0.0
    %v857 = vmax.f32 %v841, 0.0
    %v858 = vmax.f32 %v842, 0.0
    %v859 = vmax.f32 %v843, 0.0
    %v860 = vmax.f32 %v844, 0.0
    %v861 = vmax.f32 %v845, 0.0
    %v862 = vmax.f32 %v846, 0.0
    %v863 = vmax.f32 %v847, 0.0
    %v864 = vmax.f32 %v848, 0.0
    %v865 = vrsqrt.pop %v849
    %v866 = vmul.f32 %v849, %v865
    %vm867 = vcmp.eq.f32.partialorder %v849, inf
    %v868 = vsel %vm867, %v849, %v866
    %vm869 = vcmp.eq.f32.partialorder %v849, 0.0
    %v870 = vand.u32 %v849, 2147483648
    %v871 = vsel %vm869, %v870, %v868
    %v872 = vrsqrt.pop %v850
    %v873 = vmul.f32 %v850, %v872
    %vm874 = vcmp.eq.f32.partialorder %v850, inf
    %v875 = vsel %vm874, %v850, %v873
    %vm876 = vcmp.eq.f32.partialorder %v850, 0.0
    %v877 = vand.u32 %v850, 2147483648
    %v878 = vsel %vm876, %v877, %v875
    %v879 = vrsqrt.pop %v851
    %v880 = vmul.f32 %v851, %v879
    %vm881 = vcmp.eq.f32.partialorder %v851, inf
    %v882 = vsel %vm881, %v851, %v880
    %vm883 = vcmp.eq.f32.partialorder %v851, 0.0
    %v884 = vand.u32 %v851, 2147483648
    %v885 = vsel %vm883, %v884, %v882
    %v886 = vrsqrt.pop %v852
    %v887 = vmul.f32 %v852, %v886
    %vm888 = vcmp.eq.f32.partialorder %v852, inf
    %v889 = vsel %vm888, %v852, %v887
    %vm890 = vcmp.eq.f32.partialorder %v852, 0.0
    %v891 = vand.u32 %v852, 2147483648
    %v892 = vsel %vm890, %v891, %v889
    %v893 = vrsqrt.pop %v853
    %v894 = vmul.f32 %v853, %v893
    %vm895 = vcmp.eq.f32.partialorder %v853, inf
    %v896 = vsel %vm895, %v853, %v894
    %vm897 = vcmp.eq.f32.partialorder %v853, 0.0
    %v898 = vand.u32 %v853, 2147483648
    %v899 = vsel %vm897, %v898, %v896
    %v900 = vrsqrt.pop %v854
    %v901 = vmul.f32 %v854, %v900
    %vm902 = vcmp.eq.f32.partialorder %v854, inf
    %v903 = vsel %vm902, %v854, %v901
    %vm904 = vcmp.eq.f32.partialorder %v854, 0.0
    %v905 = vand.u32 %v854, 2147483648
    %v906 = vsel %vm904, %v905, %v903
    %v907 = vrsqrt.pop %v855
    %v908 = vmul.f32 %v855, %v907
    %vm909 = vcmp.eq.f32.partialorder %v855, inf
    %v910 = vsel %vm909, %v855, %v908
    %vm911 = vcmp.eq.f32.partialorder %v855, 0.0
    %v912 = vand.u32 %v855, 2147483648
    %v913 = vsel %vm911, %v912, %v910
    %v914 = vrsqrt.pop %v856
    %v915 = vmul.f32 %v856, %v914
    %vm916 = vcmp.eq.f32.partialorder %v856, inf
    %v917 = vsel %vm916, %v856, %v915
    %vm918 = vcmp.eq.f32.partialorder %v856, 0.0
    %v919 = vand.u32 %v856, 2147483648
    %v920 = vsel %vm918, %v919, %v917
    %v921 = vrsqrt.pop %v857
    %v922 = vmul.f32 %v857, %v921
    %vm923 = vcmp.eq.f32.partialorder %v857, inf
    %v924 = vsel %vm923, %v857, %v922
    %vm925 = vcmp.eq.f32.partialorder %v857, 0.0
    %v926 = vand.u32 %v857, 2147483648
    %v927 = vsel %vm925, %v926, %v924
    %v928 = vrsqrt.pop %v858
    %v929 = vmul.f32 %v858, %v928
    %vm930 = vcmp.eq.f32.partialorder %v858, inf
    %v931 = vsel %vm930, %v858, %v929
    %vm932 = vcmp.eq.f32.partialorder %v858, 0.0
    %v933 = vand.u32 %v858, 2147483648
    %v934 = vsel %vm932, %v933, %v931
    %v935 = vrsqrt.pop %v859
    %v936 = vmul.f32 %v859, %v935
    %vm937 = vcmp.eq.f32.partialorder %v859, inf
    %v938 = vsel %vm937, %v859, %v936
    %vm939 = vcmp.eq.f32.partialorder %v859, 0.0
    %v940 = vand.u32 %v859, 2147483648
    %v941 = vsel %vm939, %v940, %v938
    %v942 = vrsqrt.pop %v860
    %v943 = vmul.f32 %v860, %v942
    %vm944 = vcmp.eq.f32.partialorder %v860, inf
    %v945 = vsel %vm944, %v860, %v943
    %vm946 = vcmp.eq.f32.partialorder %v860, 0.0
    %v947 = vand.u32 %v860, 2147483648
    %v948 = vsel %vm946, %v947, %v945
    %v949 = vrsqrt.pop %v861
    %v950 = vmul.f32 %v861, %v949
    %vm951 = vcmp.eq.f32.partialorder %v861, inf
    %v952 = vsel %vm951, %v861, %v950
    %vm953 = vcmp.eq.f32.partialorder %v861, 0.0
    %v954 = vand.u32 %v861, 2147483648
    %v955 = vsel %vm953, %v954, %v952
    %v956 = vrsqrt.pop %v862
    %v957 = vmul.f32 %v862, %v956
    %vm958 = vcmp.eq.f32.partialorder %v862, inf
    %v959 = vsel %vm958, %v862, %v957
    %vm960 = vcmp.eq.f32.partialorder %v862, 0.0
    %v961 = vand.u32 %v862, 2147483648
    %v962 = vsel %vm960, %v961, %v959
    %v963 = vrsqrt.pop %v863
    %v964 = vmul.f32 %v863, %v963
    %vm965 = vcmp.eq.f32.partialorder %v863, inf
    %v966 = vsel %vm965, %v863, %v964
    %vm967 = vcmp.eq.f32.partialorder %v863, 0.0
    %v968 = vand.u32 %v863, 2147483648
    %v969 = vsel %vm967, %v968, %v966
    %v970 = vrsqrt.pop %v864
    %v971 = vmul.f32 %v864, %v970
    %vm972 = vcmp.eq.f32.partialorder %v864, inf
    %v973 = vsel %vm972, %v864, %v971
    %vm974 = vcmp.eq.f32.partialorder %v864, 0.0
    %v975 = vand.u32 %v864, 2147483648
    %v976 = vsel %vm974, %v975, %v973
    %977 = vst [vmem:[#allocation8] sm:$0xff] %v871
    %978 = vst [vmem:[#allocation8 + $0x8] sm:$0xff] %v878
    %979 = vst [vmem:[#allocation8 + $0x10] sm:$0xff] %v885
    %980 = vst [vmem:[#allocation8 + $0x18] sm:$0xff] %v892
    %981 = vst [vmem:[#allocation8 + $0x20] sm:$0xff] %v899
    %982 = vst [vmem:[#allocation8 + $0x28] sm:$0xff] %v906
    %983 = vst [vmem:[#allocation8 + $0x30] sm:$0xff] %v913
    %984 = vst [vmem:[#allocation8 + $0x38] sm:$0xff] %v920
    %985 = vst [vmem:[#allocation8 + $0x40] sm:$0xff] %v927
    %986 = vst [vmem:[#allocation8 + $0x48] sm:$0xff] %v934
    %987 = vst [vmem:[#allocation8 + $0x50] sm:$0xff] %v941
    %988 = vst [vmem:[#allocation8 + $0x58] sm:$0xff] %v948
    %989 = vst [vmem:[#allocation8 + $0x60] sm:$0xff] %v955
    %990 = vst [vmem:[#allocation8 + $0x68] sm:$0xff] %v962
    %991 = vst [vmem:[#allocation8 + $0x70] sm:$0xff] %v969
    %992 = vst [vmem:[#allocation8 + $0x78] sm:$0xff] %v976
    // Predicated region
    $region26: #{tpu_custom_call.1} parent=1 // pred_check
      _
    $region27: #{tpu_custom_call.1} parent=1 // pred_check_branch
      %994 = sbr.rel (0) target = $region29
    $region28: #{tpu_custom_call.1} parent=1 // pred_region
      %s996 = ssub.s32 2048, 2048
      %997 = vsyncadd [#allocation4], %s996
      %s998 = sshll.u32 [#allocation8], 4
      %s999 = int_to_ptr.vmem [resolvable:$true] %s998
      %1004 = dma.vmem_to_hbm [thread:$0]  %s999, 2048, %s3, [#allocation4], 128, 128, 8
    $region29: #{tpu_custom_call.1} parent=1 // pred_fallthru
      _
    // Predicated region
    $region30: #{tpu_custom_call.1} parent=1 // pred_check
      _
    $region31: #{tpu_custom_call.1} parent=1 // pred_check_branch
      %1006 = sbr.rel (0) target = $region33
    $region32: #{tpu_custom_call.1} parent=1 // pred_region
      %1007 = dma.done [#allocation4], 2048
    $region33: #{tpu_custom_call.1} parent=1 // pred_fallthru
      _
    %1008 = vsyncpa [#allocation3], 1
    %1009 = vsyncpa [#allocation6], 1
    %1010 = vsyncpa [#allocation4], 1

</llo_original>
